<compile_context>
chip_gen: v7x
topology: tpu7x:2x2x1
jax: 0.10.0
libtpu: 0.0.40
codegen_flags: <defaults>
</compile_context>

<pallas_src>
import random

import jax
import jax.numpy as jnp
from jax.experimental import pallas as pl
from jax.experimental.pallas import tpu as pltpu


def _gain_kernel(scale_ref, x_ref, o_ref):
    # scale_ref: (1,) float32 scalar-prefetch operand (SMEM).
    # x_ref / o_ref: (block_rows, block_lanes) VMEM tiles.
    s = scale_ref[0]
    y = x_ref[...].astype(jnp.float32) * s
    o_ref[...] = jnp.clip(y, -1.0, 1.0).astype(o_ref.dtype)


def _block_shape(rows, lanes, itemsize, target_bytes):
    """Pick a (block_rows, block_lanes) tile of roughly `target_bytes`, obeying the
    (sublane, 128) divisibility-or-full-dim rule for the given dtype."""
    sub_min = max(8, 32 // itemsize)            # 8 for f32, 16 for bf16, 32 for int8/fp8
    target_elems = max(1, target_bytes // itemsize)

    # A block always occupies >= sub_min sublanes of VMEM (short rows get padded),
    # so budget the lane width against that to avoid VMEM blow-ups on (1, T) views.
    lane_budget = max(128, target_elems // sub_min)
    if lanes <= lane_budget:
        bl = lanes                               # full dim: always legal, single column block
    else:
        bl = (lane_budget // 128) * 128          # multiple of 128; ragged edge block is masked

    row_budget = max(1, target_elems // bl)
    if rows <= sub_min or row_budget >= rows:
        br = rows                                # full dim: always legal
    else:
        br = max(sub_min, (row_budget // sub_min) * sub_min)
    return br, bl


def gain_forward(audio: jax.Array, gain_db, *, target_block_bytes: int = 4 << 20) -> jax.Array:
    """Apply Vol(gain_db, gain_type='db'): scale by 10**(dB/20), then clamp to [-1, 1]."""
    if not jnp.issubdtype(audio.dtype, jnp.floating):
        raise TypeError("Gain expects floating-point audio (PyTorch Vol semantics).")

    orig_shape = audio.shape
    n = audio.size
    if n == 0:
        return audio

    # --- Build a 2D, lane-dense view with zero extra HBM traffic when possible. ---
    pad = 0
    if n % 128 == 0:
        # Free reshape (row-major bitcast): widest lane in {1024,...,128} dividing numel.
        lane = next(l for l in (1024, 512, 256, 128) if n % l == 0)
        x2d = audio.reshape(n // lane, lane)
    elif audio.ndim >= 2 and orig_shape[-1] >= 128:
        # Free reshape of leading dims; ragged last dim handled by masked edge blocks.
        x2d = audio.reshape(-1, orig_shape[-1])
    else:
        # Rare path (short 1-D / tiny last dim, not 128-aligned): pad by <= 127 samples,
        # sliced off after the kernel.
        n_pad = ((n + 127) // 128) * 128
        pad = n_pad - n
        lane = next(l for l in (1024, 512, 256, 128) if n_pad % l == 0)
        x2d = jnp.pad(audio.reshape(-1), (0, pad)).reshape(n_pad // lane, lane)

    rows, lanes = x2d.shape
    br, bl = _block_shape(rows, lanes, x2d.dtype.itemsize, target_block_bytes)
    grid = (pl.cdiv(rows, br), pl.cdiv(lanes, bl))

    # dB -> linear amplitude in float32 (traceable if gain_db is a jax scalar).
    scale = (jnp.float32(10.0) ** (jnp.asarray(gain_db, jnp.float32) / 20.0)).reshape(1)

    out2d = pl.pallas_call(
        _gain_kernel,
        out_shape=jax.ShapeDtypeStruct((rows, lanes), audio.dtype),
        grid_spec=pltpu.PrefetchScalarGridSpec(
            num_scalar_prefetch=1,                              # `scale` lands in SMEM before the grid runs
            grid=grid,
            in_specs=[pl.BlockSpec((br, bl), lambda i, j, s: (i, j))],
            out_specs=pl.BlockSpec((br, bl), lambda i, j, s: (i, j)),
        ),
        compiler_params=pltpu.CompilerParams(
            dimension_semantics=("parallel", "parallel"),       # megacore split on v7x; no-op on v5e/v6e
            vmem_limit_bytes=32 << 20,                          # 4 MiB blocks * (in+out) * double-buffer = 16 MiB
        ),
        # NOTE: input_output_aliases={1: 0} would drop the separate output allocation,
        # but only pays off when the caller donates `audio`; left off to avoid a
        # defensive copy on non-donated inputs.
    )(scale, x2d)

    if pad:
        return out2d.reshape(-1)[:n].reshape(orig_shape)
    return out2d.reshape(orig_shape)


class Gain:
    """JAX/Pallas port of the PyTorch Gain module (random dB gain + clamp)."""

    def __init__(self, min_gain: float = -20.0, max_gain: float = -1.0):
        self.min_gain = min_gain
        self.max_gain = max_gain

    def __call__(self, audio: jax.Array, rng=random) -> jax.Array:
        # TODO(synk): gain draw stays on the host (matches torch's `random.uniform`).
        gain_db = rng.uniform(self.min_gain, self.max_gain)
        return gain_forward(audio, gain_db)


if __name__ == "__main__":
    # Deterministic inputs / randomness. T is deliberately NOT a multiple of 128
    # to exercise the ragged (no-pad, masked edge block) path.
    key = jax.random.PRNGKey(0)
    C, T = 4, 1000
    audio = jax.random.normal(key, (C, T), dtype=jnp.float32) * 1.5  # some samples exceed |1|

    py_rng = random.Random(0)  # deterministic gain draw
    module = Gain(min_gain=-20.0, max_gain=-1.0)

    out = module(audio, py_rng)
    out = jax.block_until_ready(out)

    # Reference check in plain JAX.
    py_rng_ref = random.Random(0)
    gain_db = py_rng_ref.uniform(-20.0, -1.0)
    ref = jnp.clip(audio * jnp.float32(10.0 ** (gain_db / 20.0)), -1.0, 1.0)
    assert out.shape == (C, T)
    assert out.dtype == audio.dtype
    assert jnp.allclose(out, ref, atol=1e-6), "mismatch vs reference"

    # Also exercise the fully lane-dense (numel % 128 == 0) zero-copy path.
    audio2 = jax.random.normal(jax.random.PRNGKey(1), (2, 4096), dtype=jnp.float32) * 1.5
    out2 = jax.block_until_ready(gain_forward(audio2, gain_db))
    ref2 = jnp.clip(audio2 * jnp.float32(10.0 ** (gain_db / 20.0)), -1.0, 1.0)
    assert jnp.allclose(out2, ref2, atol=1e-6), "mismatch vs reference (dense path)"

    print("KERNEL_OK")
</pallas_src>

<mosaic_0001>
module attributes {stable_mosaic.version = 11 : i64} {
  func.func @_gain_kernel(%arg0: i32, %arg1: i32, %arg2: memref<1xf32, #tpu.memory_space<smem>>, %arg3: memref<4x1000xf32, #tpu.memory_space<vmem>>, %arg4: memref<4x1000xf32, #tpu.memory_space<vmem>>) attributes {dimension_semantics = [#tpu.dimension_semantics<parallel>, #tpu.dimension_semantics<parallel>], iteration_bounds = array<i64: 1, 1>, scalar_prefetch = 1 : i64, scratch_operands = 0 : i64, tpu.core_type = #tpu.core_type<tc>, window_params = [{transform_indices = @transform_0, window_bounds = array<i64: 4, 1000>}, {transform_indices = @transform_1, window_bounds = array<i64: 4, 1000>}]} {
    %c0 = arith.constant 0 : index
    %0 = memref.load %arg2[%c0] : memref<1xf32, #tpu.memory_space<smem>>
    %c0_0 = arith.constant 0 : index
    %c0_1 = arith.constant 0 : index
    %1 = vector.load %arg3[%c0_0, %c0_1] : memref<4x1000xf32, #tpu.memory_space<vmem>>, vector<4x1000xf32>
    %2 = vector.broadcast %0 : f32 to vector<4x1000xf32>
    %3 = arith.mulf %1, %2 : vector<4x1000xf32>
    %cst = arith.constant -1.000000e+00 : f32
    %cst_2 = arith.constant 1.000000e+00 : f32
    %4 = vector.broadcast %cst : f32 to vector<4x1000xf32>
    %5 = arith.maximumf %4, %3 : vector<4x1000xf32>
    %6 = vector.broadcast %cst_2 : f32 to vector<4x1000xf32>
    %7 = arith.minimumf %6, %5 : vector<4x1000xf32>
    %c0_3 = arith.constant 0 : index
    %c0_4 = arith.constant 0 : index
    %8 = vector.load %arg4[%c0_3, %c0_4] : memref<4x1000xf32, #tpu.memory_space<vmem>>, vector<4x1000xf32>
    tpu.vector_store %arg4[%c0_3, %c0_4], %7 {strides = array<i32>} : memref<4x1000xf32, #tpu.memory_space<vmem>>, vector<4x1000xf32>,
    return
  }
  func.func @transform_0(%arg0: i32, %arg1: i32, %arg2: memref<1xf32, #tpu.memory_space<smem>>) -> (i32, i32) {
    %c0_i32 = arith.constant 0 : i32
    return %arg0, %arg1 : i32, i32
  }
  func.func @transform_1(%arg0: i32, %arg1: i32, %arg2: memref<1xf32, #tpu.memory_space<smem>>) -> (i32, i32) {
    %c0_i32 = arith.constant 0 : i32
    return %arg0, %arg1 : i32, i32
  }
}

</mosaic_0001>

<llo_original>
// kernel: tpu_custom_call.1
$region0: #{tpu_custom_call.1}
  #allocation0 [shape = 'u32[]', space=smem, size = 0x4, offset = 0x4, fixed_abs, tag = 'smem constant byte address 0x4 - core index']
  #allocation1 [shape = 'u32[144,128]{1,0:T(1,128)}', space=vmem, size = 0x12000, scoped, tag = 'internal scratch']
  #allocation2 [shape = 's32[1]{0}', space=sflag, size = 0x4, scoped, tag = 'scoped memory for tpu_custom_call.1']
  #allocation3 [shape = 'f32[1]{0:T(128)S(6)}', space=smem, size = 0x200, scoped, tag = 'prefetched SMEM operand 0']
  %s0 = inlined_call_operand.<no memory space> [shape: f32[1], index: 0, kind: input, shape index: {}]
  %s1 = inlined_call_operand.hbm [shape: f32[4,1000], index: 1, kind: input, shape index: {}]
  %s2 = inlined_call_operand.hbm [shape: f32[4,1000], index: 2, kind: output, shape index: {}]
  %s3 = sld [smem:[#allocation0]]
  $region18: #{tpu_custom_call.1} parent=0
    _
  %s5 = ssub.s32 1, %s3
  %s6 = scalar_select 0, %s5, %s3
  %7 = sst [smem:[#allocation3]] %s0
  $region1: #{tpu_custom_call.1} parent=0
    #allocation4 [shape = 'u8[16384]{0}', space=vmem, size = 0x4000, scoped, tag = 'input window, operand 1, single buffered']
    #allocation5 [shape = 's32[1]{0}', space=sflag, size = 0x4, scoped, tag = 'scoped memory for tpu_custom_call.1']
    #allocation6 [shape = 's32[1]{0}', space=sflag, size = 0x4, scoped, tag = 'scoped memory for tpu_custom_call.1']
    #allocation7 [shape = 'u8[16384]{0}', space=vmem, size = 0x4000, scoped, tag = 'output window, operand 0, single buffered']
    %8 = vsyncpa [#allocation5], 0
    %9 = vsyncpa [#allocation6], 0
    // Predicated region
    $region2: #{tpu_custom_call.1} parent=1 // pred_check
      _
    $region3: #{tpu_custom_call.1} parent=1 // pred_check_branch
      %11 = sbr.rel (0) target = $region5
    $region4: #{tpu_custom_call.1} parent=1 // pred_region
      %s13 = ssub.s32 512, 512
      %14 = vsyncadd [#allocation5], %s13
      %s16 = sshll.u32 [#allocation4], 4
      %s17 = int_to_ptr.vmem [resolvable:$true] %s16
      %19 = dma.hbm_to_vmem [thread:$0]  %s1, 512, %s17, [#allocation5]
    $region5: #{tpu_custom_call.1} parent=1 // pred_fallthru
      _
    // Predicated region
    $region6: #{tpu_custom_call.1} parent=1 // pred_check
      _
    $region7: #{tpu_custom_call.1} parent=1 // pred_check_branch
      %21 = sbr.rel (0) target = $region9
    $region8: #{tpu_custom_call.1} parent=1 // pred_region
      %22 = dma.done [#allocation5], 512
    $region9: #{tpu_custom_call.1} parent=1 // pred_fallthru
      _
    %s23 = sld [smem:[#allocation3]]
    %v24 = vld [vmem:[#allocation4] sm:$0xff]
    %v25 = vld [vmem:[#allocation4 + $0x8] sm:$0xff]
    %v26 = vld [vmem:[#allocation4 + $0x10] sm:$0xff]
    %v27 = vld [vmem:[#allocation4 + $0x18] sm:$0xff]
    %v28 = vstv %s23
    %v29 = vmul.f32 %v24, %v28
    %v30 = vmul.f32 %v25, %v28
    %v31 = vmul.f32 %v26, %v28
    %v32 = vmul.f32 %v27, %v28
    %v33 = vmax.f32 %v29, -1.0
    %v34 = vmax.f32 %v30, -1.0
    %v35 = vmax.f32 %v31, -1.0
    %v36 = vmax.f32 %v32, -1.0
    %v37 = vmin.f32 %v33, 1.0
    %v38 = vmin.f32 %v34, 1.0
    %v39 = vmin.f32 %v35, 1.0
    %v40 = vmin.f32 %v36, 1.0
    %41 = vst [vmem:[#allocation7] sm:$0xff] %v37
    %42 = vst [vmem:[#allocation7 + $0x8] sm:$0xff] %v38
    %43 = vst [vmem:[#allocation7 + $0x10] sm:$0xff] %v39
    %vm44 = vcmask 1043456
    %vm45 = vcmask 850948
    %vm46 = vmor %vm45, %vm44
    %47 = vst.msk [vmem:[#allocation7 + $0x18] sm:$0xff] %vm46, %v40
    // Predicated region
    $region10: #{tpu_custom_call.1} parent=1 // pred_check
      _
    $region11: #{tpu_custom_call.1} parent=1 // pred_check_branch
      %49 = sbr.rel (0) target = $region13
    $region12: #{tpu_custom_call.1} parent=1 // pred_region
      %s51 = ssub.s32 512, 512
      %52 = vsyncadd [#allocation6], %s51
      %s54 = sshll.u32 [#allocation7], 4
      %s55 = int_to_ptr.vmem [resolvable:$true] %s54
      %57 = dma.vmem_to_hbm [thread:$0]  %s55, 512, %s2, [#allocation6]
    $region13: #{tpu_custom_call.1} parent=1 // pred_fallthru
      _
    // Predicated region
    $region14: #{tpu_custom_call.1} parent=1 // pred_check
      _
    $region15: #{tpu_custom_call.1} parent=1 // pred_check_branch
      %59 = sbr.rel (0) target = $region17
    $region16: #{tpu_custom_call.1} parent=1 // pred_region
      %60 = dma.done [#allocation6], 512
    $region17: #{tpu_custom_call.1} parent=1 // pred_fallthru
      _
    %61 = vsyncpa [#allocation5], 1
    %62 = vsyncpa [#allocation6], 1

</llo_original>
